<compile_context>
chip_gen: v7x
topology: tpu7x:2x2x1
jax: 0.10.0
libtpu: 0.0.40
codegen_flags: <defaults>
</compile_context>

<pallas_src>
import functools

import jax
import jax.numpy as jnp
import numpy as np
from jax.experimental import pallas as pl
from jax.experimental.pallas import tpu as pltpu

CL = 40                # params['cl'] from the PyTorch module
DEFAULT_TILE_B = 4096  # rows/grid step: 4k rows * 128-lane-padded f32 ~= 2 MiB/buffer,
                       # double-buffered well under v7x's 64 MiB VMEM (and v5e/v6e).


def _round_up(x, m):
    return ((x + m - 1) // m) * m


def _contrastive_loss_kernel(x_ref, label_ref, temp_ref, out_ref, *,
                             total_rows, mask_rows):
    # x_ref:     (TILE_B, CL) VMEM (any float dtype; cast to f32 after load)
    # label_ref: (TILE_B, 1)  int32, VMEM
    # temp_ref:  (1, 1)       float32, SMEM
    # out_ref:   (1, 1)       float32, SMEM  (per-tile un-normalized loss sum)
    x = x_ref[...].astype(jnp.float32)          # (TB, C)
    labels = label_ref[...]                     # (TB, 1)
    inv_t = 1.0 / temp_ref[0, 0]                # single scalar divide per tile

    tb, c = x.shape
    col = jax.lax.broadcasted_iota(jnp.int32, (tb, c), 1)
    is_pos = col == labels                      # (TB, C) bool; never materialized as f32

    # Row max for numerical stability (algebraically identical to the PyTorch form).
    m = jnp.max(x, axis=1, keepdims=True)                             # (TB, 1)
    # Positive logit x_y via select + reduce (no float mask multiply).
    pos = jnp.sum(jnp.where(is_pos, x, 0.0), axis=1, keepdims=True)   # (TB, 1)

    z = jnp.exp((x - m) * inv_t)                                      # (TB, C) -> EUP
    # Negative-class sum: drop the positive column from the same exp tile.
    neg = jnp.sum(jnp.where(is_pos, 0.0, z), axis=1, keepdims=True)   # (TB, 1)

    # loss_row = -log(pos_sim / neg_sim) = log(sum_{j!=y} exp(x_j/t)) - x_y/t
    loss = jnp.log(neg) + (m - pos) * inv_t                           # (TB, 1)

    if mask_rows:
        # Mask rows of a ragged last tile so padding never biases the sum.
        row = jax.lax.broadcasted_iota(jnp.int32, (tb, 1), 0) + pl.program_id(0) * tb
        loss = jnp.where(row < total_rows, loss, 0.0)

    out_ref[0, 0] = jnp.sum(loss)


def contrastive_loss(x, label, temperature, *, tile_b=DEFAULT_TILE_B):
    """x: (B, CL) float (f32/bf16), label: (B,) int, temperature: scalar."""
    B, C = x.shape
    assert C == CL
    tb = min(tile_b, _round_up(B, 8))        # small batches -> single tile
    num_tiles = (B + tb - 1) // tb
    mask_rows = (num_tiles * tb) != B        # only pay for the iota/select when ragged

    label_2d = label.astype(jnp.int32).reshape(B, 1)
    temp_2d = jnp.asarray(temperature, dtype=jnp.float32).reshape(1, 1)

    partial = pl.pallas_call(
        functools.partial(_contrastive_loss_kernel,
                          total_rows=B, mask_rows=mask_rows),
        out_shape=jax.ShapeDtypeStruct((num_tiles, 1), jnp.float32),
        grid=(num_tiles,),
        in_specs=[
            pl.BlockSpec((tb, C), lambda i: (i, 0)),                  # logits tile (VMEM)
            pl.BlockSpec((tb, 1), lambda i: (i, 0)),                  # labels tile (VMEM)
            pl.BlockSpec((1, 1), lambda i: (0, 0),
                         memory_space=pltpu.MemorySpace.SMEM),        # temperature scalar
        ],
        out_specs=pl.BlockSpec((1, 1), lambda i: (i, 0),
                               memory_space=pltpu.MemorySpace.SMEM),  # per-tile partial sum
        compiler_params=pltpu.CompilerParams(
            dimension_semantics=("parallel",),   # tiles independent -> both TCs on v7x
            vmem_limit_bytes=32 * 1024 * 1024,
        ),
    )(x, label_2d, temp_2d)

    # Tiny epilogue: combine per-tile partial sums and normalize by the true B.
    return jnp.sum(partial) / B


def _reference_loss(x, label, temperature):
    # Pure-JAX mirror of the PyTorch forward, for sanity checking.
    x = x.astype(jnp.float32)
    pos_mask = jax.nn.one_hot(label, CL, dtype=jnp.float32)
    pos_sim = jnp.exp(jnp.sum(x * pos_mask, axis=1) / temperature)
    neg_sim = jnp.sum(jnp.exp(x / temperature) * (1.0 - pos_mask), axis=1)
    return jnp.mean(-jnp.log(pos_sim / neg_sim))


if __name__ == "__main__":
    key = jax.random.PRNGKey(0)
    k1, k2, k3, k4 = jax.random.split(key, 4)

    # Small case: B=8, single tile.
    B = 8
    x = jax.random.normal(k1, (B, CL), dtype=jnp.float32)
    label = jax.random.randint(k2, (B,), 0, CL, dtype=jnp.int32)
    temperature = 0.5

    loss = contrastive_loss(x, label, temperature)
    jax.block_until_ready(loss)
    ref = _reference_loss(x, label, temperature)
    np.testing.assert_allclose(np.asarray(loss), np.asarray(ref), rtol=1e-5, atol=1e-5)

    # Ragged multi-tile case: B=300 with tile_b=128 exercises the grid + row masking.
    B2 = 300
    x2 = jax.random.normal(k3, (B2, CL), dtype=jnp.float32)
    label2 = jax.random.randint(k4, (B2,), 0, CL, dtype=jnp.int32)
    loss2 = contrastive_loss(x2, label2, 0.7, tile_b=128)
    jax.block_until_ready(loss2)
    ref2 = _reference_loss(x2, label2, 0.7)
    np.testing.assert_allclose(np.asarray(loss2), np.asarray(ref2), rtol=1e-5, atol=1e-5)

    print("KERNEL_OK")
</pallas_src>

<mosaic_0001>
module attributes {stable_mosaic.version = 11 : i64} {
  func.func @_contrastive_loss_kernel(%arg0: i32, %arg1: memref<8x40xf32, #tpu.memory_space<vmem>>, %arg2: memref<8x1xi32, #tpu.memory_space<vmem>>, %arg3: memref<1x1xf32, #tpu.memory_space<smem>>, %arg4: memref<1x1xf32, #tpu.memory_space<smem>>) attributes {dimension_semantics = [#tpu.dimension_semantics<parallel>], iteration_bounds = array<i64: 1>, scalar_prefetch = 0 : i64, scratch_operands = 0 : i64, tpu.core_type = #tpu.core_type<tc>, window_params = [{transform_indices = @transform_0, window_bounds = array<i64: 8, 40>}, {transform_indices = @transform_1, window_bounds = array<i64: 8, 1>}, {transform_indices = @transform_2, window_bounds = array<i64: 1, 1>}, {transform_indices = @transform_3, window_bounds = array<i64: 1, 1>}]} {
    %c0 = arith.constant 0 : index
    %c0_0 = arith.constant 0 : index
    %0 = vector.load %arg1[%c0, %c0_0] : memref<8x40xf32, #tpu.memory_space<vmem>>, vector<8x40xf32>
    %c0_1 = arith.constant 0 : index
    %c0_2 = arith.constant 0 : index
    %1 = vector.load %arg2[%c0_1, %c0_2] : memref<8x1xi32, #tpu.memory_space<vmem>>, vector<8x1xi32>
    %c0_3 = arith.constant 0 : index
    %c0_4 = arith.constant 0 : index
    %2 = memref.load %arg3[%c0_3, %c0_4] : memref<1x1xf32, #tpu.memory_space<smem>>
    %cst = arith.constant 1.000000e+00 : f32
    %3 = arith.divf %cst, %2 : f32
    %4 = tpu.iota {dimensions = array<i32: 1>} : vector<8x40xi32>
    %5 = vector.broadcast %1 : vector<8x1xi32> to vector<8x40xi32>
    %6 = arith.cmpi eq, %4, %5 : vector<8x40xi32>
    %cst_5 = arith.constant dense<0xFF800000> : vector<8xf32>
    %7 = vector.multi_reduction <maximumf>, %0, %cst_5 [1] : vector<8x40xf32> to vector<8xf32>
    %8 = vector.shape_cast %7 : vector<8xf32> to vector<8x1xf32>
    %cst_6 = arith.constant 0.000000e+00 : f32
    %9 = vector.broadcast %cst_6 : f32 to vector<8x40xf32>
    %10 = arith.select %6, %0, %9 : vector<8x40xi1>, vector<8x40xf32>
    %cst_7 = arith.constant dense<0.000000e+00> : vector<8xf32>
    %11 = vector.multi_reduction <add>, %10, %cst_7 [1] : vector<8x40xf32> to vector<8xf32>
    %12 = vector.shape_cast %11 : vector<8xf32> to vector<8x1xf32>
    %13 = vector.broadcast %8 : vector<8x1xf32> to vector<8x40xf32>
    %14 = arith.subf %0, %13 : vector<8x40xf32>
    %15 = vector.broadcast %3 : f32 to vector<8x40xf32>
    %16 = arith.mulf %14, %15 : vector<8x40xf32>
    %17 = math.exp %16 : vector<8x40xf32>
    %cst_8 = arith.constant 0.000000e+00 : f32
    %18 = vector.broadcast %cst_8 : f32 to vector<8x40xf32>
    %19 = arith.select %6, %18, %17 : vector<8x40xi1>, vector<8x40xf32>
    %cst_9 = arith.constant dense<0.000000e+00> : vector<8xf32>
    %20 = vector.multi_reduction <add>, %19, %cst_9 [1] : vector<8x40xf32> to vector<8xf32>
    %21 = vector.shape_cast %20 : vector<8xf32> to vector<8x1xf32>
    %22 = math.log %21 : vector<8x1xf32>
    %23 = arith.subf %8, %12 : vector<8x1xf32>
    %24 = vector.broadcast %3 : f32 to vector<8x1xf32>
    %25 = arith.mulf %23, %24 : vector<8x1xf32>
    %26 = arith.addf %22, %25 : vector<8x1xf32>
    %27 = vector.shape_cast %26 : vector<8x1xf32> to vector<1x8x1xf32>
    %cst_10 = arith.constant dense<0.000000e+00> : vector<1xf32>
    %28 = vector.multi_reduction <add>, %27, %cst_10 [1, 2] : vector<1x8x1xf32> to vector<1xf32>
    %29 = vector.shape_cast %28 : vector<1xf32> to vector<1x1x1xf32>
    %30 = vector.extract %29[0, 0, 0] : f32 from vector<1x1x1xf32>
    %c0_11 = arith.constant 0 : index
    %c0_12 = arith.constant 0 : index
    %31 = memref.load %arg4[%c0_11, %c0_12] : memref<1x1xf32, #tpu.memory_space<smem>>
    memref.store %30, %arg4[%c0_11, %c0_12] : memref<1x1xf32, #tpu.memory_space<smem>>
    return
  }
  func.func @transform_0(%arg0: i32) -> (i32, i32) {
    %c0_i32 = arith.constant 0 : i32
    %c0_i32_0 = arith.constant 0 : i32
    return %arg0, %c0_i32 : i32, i32
  }
  func.func @transform_1(%arg0: i32) -> (i32, i32) {
    %c0_i32 = arith.constant 0 : i32
    %c0_i32_0 = arith.constant 0 : i32
    return %arg0, %c0_i32 : i32, i32
  }
  func.func @transform_2(%arg0: i32) -> (i32, i32) {
    %c0_i32 = arith.constant 0 : i32
    %c0_i32_0 = arith.constant 0 : i32
    %c0_i32_1 = arith.constant 0 : i32
    return %c0_i32, %c0_i32_0 : i32, i32
  }
  func.func @transform_3(%arg0: i32) -> (i32, i32) {
    %c0_i32 = arith.constant 0 : i32
    %c0_i32_0 = arith.constant 0 : i32
    return %arg0, %c0_i32 : i32, i32
  }
}

</mosaic_0001>

<llo_original>
// kernel: tpu_custom_call.1
$region0: #{tpu_custom_call.1}
  #allocation0 [shape = 'u32[]', space=smem, size = 0x4, offset = 0x4, fixed_abs, tag = 'smem constant byte address 0x4 - core index']
  #allocation1 [shape = 'u32[144,128]{1,0:T(1,128)}', space=vmem, size = 0x12000, scoped, tag = 'internal scratch']
  #allocation2 [shape = 'f32[1,1]{1,0:T(1,128)S(6)}', space=smem, size = 0x200, scoped, tag = 'scoped memory for tpu_custom_call.1']
  %s0 = inlined_call_operand.vmem [shape: f32[8,40], index: 0, kind: input, shape index: {}]
  %s1 = inlined_call_operand.vmem [shape: s32[8,1], index: 1, kind: input, shape index: {}]
  %s2 = inlined_call_operand.<no memory space> [shape: f32[1,1], index: 2, kind: input, shape index: {}]
  %s3 = inlined_call_operand.hbm [shape: f32[1,1], index: 3, kind: output, shape index: {}]
  %s4 = sld [smem:[#allocation0]]
  $region22: #{tpu_custom_call.1} parent=0
    _
  %s6 = ssub.s32 1, %s4
  %s7 = scalar_select 0, %s6, %s4
  %8 = sst [smem:[#allocation2]] %s2
  $region1: #{tpu_custom_call.1} parent=0
    #allocation3 [shape = 'u8[512]{0}', space=smem, size = 0x200, scoped, tag = 'output window, operand 0, single buffered']
    #allocation4 [shape = 's32[1]{0}', space=sflag, size = 0x4, scoped, tag = 'scoped memory for tpu_custom_call.1']
    %9 = vsyncpa [#allocation4], 0
    // Predicated region
    $region2: #{tpu_custom_call.1} parent=1 // pred_check
      _
    $region3: #{tpu_custom_call.1} parent=1 // pred_check_branch
      %11 = sbr.rel (0) target = $region5
    $region4: #{tpu_custom_call.1} parent=1 // pred_region
      _
    $region5: #{tpu_custom_call.1} parent=1 // pred_fallthru
      _
    // Predicated region
    $region6: #{tpu_custom_call.1} parent=1 // pred_check
      _
    $region7: #{tpu_custom_call.1} parent=1 // pred_check_branch
      %13 = sbr.rel (0) target = $region9
    $region8: #{tpu_custom_call.1} parent=1 // pred_region
      _
    $region9: #{tpu_custom_call.1} parent=1 // pred_fallthru
      _
    // Predicated region
    $region10: #{tpu_custom_call.1} parent=1 // pred_check
      _
    $region11: #{tpu_custom_call.1} parent=1 // pred_check_branch
      %15 = sbr.rel (0) target = $region13
    $region12: #{tpu_custom_call.1} parent=1 // pred_region
      _
    $region13: #{tpu_custom_call.1} parent=1 // pred_fallthru
      _
    %v16 = vld [vmem:[%s0] sm:$0xff]
    %v17 = vld [vmem:[%s1] sm:$0xff]
    %s18 = sld [smem:[#allocation2]]
    %v19 = vstv %s18
    %v20 = vrcp.pop %v19
    %s21 = vtos %v20
    %v22 = vlaneseq
    %v23 = vand.u32 %v22, 127
    %24 = vset.pattern.permute.xlu0 0
    %25 = vperm.xlu0 %24, %v17
    %v26 = vpop.permute.xlu0 %25
    %vm27 = vcmp.eq.s32.totalorder %v23, %v26
    %vm28 = vcmask 326656
    %v29 = vsel %vm28, %v16, -inf
    %30 = vmax.xlane.f32.xlu0 %v29
    %v31 = vpop.xlane.xlu0 %30
    %v32 = vsel %vm27, %v16, 0.0
    %v33 = vsel %vm28, %v32, 0.0
    %34 = vadd.xlane.f32.xlu0 %v33
    %v35 = vpop.xlane.xlu0 %34
    %v36 = vsub.f32 %v16, %v31
    %v37 = vstv %s21
    %v38 = vmul.f32 %v36, %v37
    %v39 = vmul.f32 %v38, 1.442695
    %v40 = vpow.pop %v39
    %v41 = vsel %vm27, 0.0, %v40
    %v42 = vsel %vm28, %v41, 0.0
    %43 = vadd.xlane.f32.xlu0 %v42
    %v44 = vpop.xlane.xlu0 %43
    %v45 = vlog2.pop %v44
    %v46 = vmul.f32 %v45, 0.6931472
    %v47 = vsub.f32 %v31, %v35
    %v48 = vmul.f32 %v47, %v37
    %v49 = vadd.f32 %v46, %v48
    %vm50 = vcmask 7168
    %v51 = vsel %vm50, %v49, 0.0
    %52 = vadd.xlane.f32.xlu0 %v51
    %v53 = vpop.xlane.xlu0 %52
    %v54 = vrot.slane %v53, 4
    %v55 = vadd.f32 %v53, %v54
    %v56 = vrot.slane %v55, 2
    %v57 = vadd.f32 %v55, %v56
    %v58 = vrot.slane %v57, 1
    %v59 = vadd.f32 %v57, %v58
    %s60 = vtos %v59
    %s61 = scalar_lea.smem [#allocation3], 0
    %62 = sst [smem:[%s61]] %s60
    // Predicated region
    $region14: #{tpu_custom_call.1} parent=1 // pred_check
      _
    $region15: #{tpu_custom_call.1} parent=1 // pred_check_branch
      %64 = sbr.rel (0) target = $region17
    $region16: #{tpu_custom_call.1} parent=1 // pred_region
      %s66 = ssub.s32 16, 16
      %67 = vsyncadd [#allocation4], %s66
      %70 = dma.smem_to_hbm [#allocation3], 16, %s3, [#allocation4]
    $region17: #{tpu_custom_call.1} parent=1 // pred_fallthru
      _
    // Predicated region
    $region18: #{tpu_custom_call.1} parent=1 // pred_check
      _
    $region19: #{tpu_custom_call.1} parent=1 // pred_check_branch
      %72 = sbr.rel (0) target = $region21
    $region20: #{tpu_custom_call.1} parent=1 // pred_region
      %73 = dma.done [#allocation4], 16
    $region21: #{tpu_custom_call.1} parent=1 // pred_fallthru
      _
    %74 = sfence
    %75 = vsyncpa [#allocation4], 1

</llo_original>
